<compile_context>
chip_gen: v7x
topology: tpu7x:2x2x1
jax: 0.10.0
libtpu: 0.0.40
codegen_flags: <defaults>
</compile_context>

<pallas_src>
import jax
import jax.numpy as jnp
from jax import lax
from jax.experimental import pallas as pl
from jax.experimental.pallas import tpu as pltpu


_TB_CANDIDATES = (1024, 512, 256, 128, 64, 32, 16, 8)
_VMEM_BUDGET_BYTES = 40 << 20      # conservative: fits v5e / v6e / v7x
_VMEM_HEADROOM_BYTES = 4 << 20


def _vmem_plan_bytes(v_pad, emb, tb, table_itemsize, out_itemsize):
    """Rough VMEM footprint for one kernel instance."""
    table_bytes = v_pad * emb * table_itemsize      # Buffered(1): single copy
    ids_bytes = 2 * tb * 4                          # double-buffered id blocks
    out_bytes = 2 * tb * emb * out_itemsize         # double-buffered output tiles
    onehot_bytes = tb * v_pad * 4                   # transient (TB, V_pad) f32 tile
    return table_bytes + ids_bytes + out_bytes + onehot_bytes


def _choose_tb(n_tokens, v_pad, emb, table_itemsize, out_itemsize, max_tb):
    cands = [
        t for t in _TB_CANDIDATES
        if t <= max_tb
        and _vmem_plan_bytes(v_pad, emb, t, table_itemsize, out_itemsize)
        <= _VMEM_BUDGET_BYTES
    ]
    if not cands:
        cands = [8]
    # 1st preference: divides N exactly AND gives >= 2 grid steps (v7x megacore).
    for t in cands:
        if n_tokens % t == 0 and n_tokens // t >= 2:
            return t
    # 2nd: divides N exactly (no padding -> no post-kernel slice copy).
    for t in cands:
        if n_tokens % t == 0:
            return t
    # 3rd: largest fitting candidate; ragged tail is padded and sliced off.
    return cands[0]


def _embedding_onehot_kernel(ids_ref, table_ref, out_ref):
    """Embedding gather for one block of tokens via one-hot MXU matmul.

    ids_ref   : VMEM (TB, 1) int32   -- token ids for this block (sublane axis)
    table_ref : VMEM (V_pad, E)      -- full (vocab-padded) table, resident
    out_ref   : VMEM (TB, E)         -- gathered embeddings for this block
    """
    tb = ids_ref.shape[0]
    v_pad = table_ref.shape[0]

    ids = jnp.clip(ids_ref[...], 0, v_pad - 1)        # (TB, 1); no HW OOB check

    # one_hot[t, v] = (ids[t] == v), built directly in (sublane, lane) layout.
    vocab_iota = lax.broadcasted_iota(jnp.int32, (tb, v_pad), 1)
    one_hot = (vocab_iota == ids).astype(table_ref.dtype)      # (TB, V_pad)

    out_ref[...] = jnp.dot(
        one_hot,
        table_ref[...],
        preferred_element_type=jnp.float32,
        precision=lax.Precision.HIGHEST,              # exact gather semantics
    ).astype(out_ref.dtype)


def backpack_lm_forward(token_ids, emb_table, *, max_tokens_per_block=1024,
                        force_pallas=False):
    """token_ids: (B, T) int, emb_table: (V, E) float -> (B, T, E)."""
    B, T = token_ids.shape
    V, E = emb_table.shape
    N = B * T

    # Small-N fast path: less than one block of useful work -> XLA gather wins.
    if not force_pallas and N < 128:
        return jnp.take(emb_table, token_ids, axis=0)

    # Pad vocab to a multiple of 128: lane-dense one-hot, full MXU contraction.
    V_pad = int(pl.cdiv(V, 128)) * 128
    table = emb_table
    if V_pad != V:
        table = jnp.pad(emb_table, ((0, V_pad - V), (0, 0)))

    out_dtype = emb_table.dtype
    table_itemsize = table.dtype.itemsize
    out_itemsize = jnp.dtype(out_dtype).itemsize

    TB = _choose_tb(N, V_pad, E, table_itemsize, out_itemsize,
                    max_tokens_per_block)
    G = int(pl.cdiv(N, TB))
    N_pad = G * TB

    ids_flat = token_ids.reshape(N).astype(jnp.int32)
    if N_pad != N:
        # TODO(synk): handle the ragged tail with a tiny separate call instead of
        # padding + the post-kernel slice copy (extra HBM traffic on the output).
        ids_flat = jnp.pad(ids_flat, (0, N_pad - N))
    ids_col = ids_flat.reshape(N_pad, 1)              # ids along the sublane axis

    cost = pl.CostEstimate(
        flops=2 * N_pad * V_pad * E,                  # one-hot matmul
        transcendentals=0,
        bytes_accessed=(N_pad * 4
                        + V_pad * E * table_itemsize
                        + N_pad * E * out_itemsize),
    )

    vmem_plan = _vmem_plan_bytes(V_pad, E, TB, table_itemsize, out_itemsize)
    vmem_limit = int(min(_VMEM_BUDGET_BYTES + _VMEM_HEADROOM_BYTES,
                         max(vmem_plan + _VMEM_HEADROOM_BYTES, 16 << 20)))

    grid_spec = pltpu.PrefetchScalarGridSpec(
        num_scalar_prefetch=0,
        grid=(G,),
        in_specs=[
            # token-id block for this grid step, already sublane-oriented
            pl.BlockSpec((TB, 1), lambda i: (i, 0)),
            # full (padded) table resident in VMEM; constant index_map, so
            # single-buffer it (double-buffering a constant block buys nothing)
            pl.BlockSpec((V_pad, E), lambda i: (0, 0),
                         pipeline_mode=pl.Buffered(1)),
        ],
        out_specs=pl.BlockSpec((TB, E), lambda i: (i, 0)),
    )

    out_flat = pl.pallas_call(
        _embedding_onehot_kernel,
        out_shape=jax.ShapeDtypeStruct((N_pad, E), out_dtype),
        grid_spec=grid_spec,
        compiler_params=pltpu.CompilerParams(
            dimension_semantics=("parallel",),        # token blocks independent
            vmem_limit_bytes=vmem_limit,
        ),
        cost_estimate=cost,
    )(ids_col, table)

    if N_pad != N:
        out_flat = out_flat[:N]
    return out_flat.reshape(B, T, E)


if __name__ == "__main__":
    # Small config consistent with BackpackLM.__init__
    vocab_size = 64
    embedding_size = 128
    B, T = 2, 8

    key = jax.random.PRNGKey(0)
    k_emb, k_ids = jax.random.split(key)

    # Deterministic "parameters": nn.Embedding weight ~ N(0, 1)
    emb_table = jax.random.normal(
        k_emb, (vocab_size, embedding_size), dtype=jnp.float32
    )
    token_ids = jax.random.randint(
        k_ids, (B, T), 0, vocab_size, dtype=jnp.int32
    )

    # force_pallas=True so the Pallas kernel itself is exercised at this toy size
    out = backpack_lm_forward(token_ids, emb_table, force_pallas=True)
    out = jax.block_until_ready(out)

    # Reference check (plain JAX gather)
    ref = emb_table[token_ids]
    assert out.shape == (B, T, embedding_size)
    assert jnp.allclose(out, ref), "mismatch vs reference embedding lookup"

    # Auto-dispatch (small-N fast path) must agree too.
    out_auto = jax.block_until_ready(backpack_lm_forward(token_ids, emb_table))
    assert jnp.allclose(out_auto, ref)

    print("KERNEL_OK")
</pallas_src>

<mosaic_0001>
module attributes {stable_mosaic.version = 11 : i64} {
  func.func @_embedding_onehot_kernel(%arg0: i32, %arg1: memref<8x1xi32, #tpu.memory_space<vmem>>, %arg2: memref<128x128xf32, #tpu.memory_space<vmem>>, %arg3: memref<8x128xf32, #tpu.memory_space<vmem>>) attributes {dimension_semantics = [#tpu.dimension_semantics<parallel>], iteration_bounds = array<i64: 2>, scalar_prefetch = 0 : i64, scratch_operands = 0 : i64, tpu.core_type = #tpu.core_type<tc>, window_params = [{transform_indices = @transform_0, window_bounds = array<i64: 8, 1>}, {pipeline_mode = #tpu.pipeline_mode<synchronous>, transform_indices = @transform_1, window_bounds = array<i64: 128, 128>}, {transform_indices = @transform_2, window_bounds = array<i64: 8, 128>}]} {
    %c0 = arith.constant 0 : index
    %c0_0 = arith.constant 0 : index
    %0 = vector.load %arg1[%c0, %c0_0] : memref<8x1xi32, #tpu.memory_space<vmem>>, vector<8x1xi32>
    %c0_i32 = arith.constant 0 : i32
    %c127_i32 = arith.constant 127 : i32
    %1 = vector.broadcast %c0_i32 : i32 to vector<8x1xi32>
    %2 = arith.maxsi %1, %0 : vector<8x1xi32>
    %3 = vector.broadcast %c127_i32 : i32 to vector<8x1xi32>
    %4 = arith.minsi %3, %2 : vector<8x1xi32>
    %5 = tpu.iota {dimensions = array<i32: 1>} : vector<8x128xi32>
    %6 = vector.broadcast %4 : vector<8x1xi32> to vector<8x128xi32>
    %7 = arith.cmpi eq, %5, %6 : vector<8x128xi32>
    %8 = arith.extui %7 : vector<8x128xi1> to vector<8x128xi32>
    %9 = arith.sitofp %8 : vector<8x128xi32> to vector<8x128xf32>
    %c0_1 = arith.constant 0 : index
    %c0_2 = arith.constant 0 : index
    %10 = vector.load %arg2[%c0_1, %c0_2] : memref<128x128xf32, #tpu.memory_space<vmem>>, vector<128x128xf32>
    %cst = arith.constant dense<0.000000e+00> : vector<8x128xf32>
    %11 = tpu.matmul %9, %10, %cst {dimension_numbers = #tpu.dot_dimension_numbers<[1], [0], [0], [1], [0, 0, 1, 1], [], []>, precision = #tpu.contract_precision<fp32>} : vector<8x128xf32>, vector<128x128xf32>, vector<8x128xf32> -> vector<8x128xf32>
    %c0_3 = arith.constant 0 : index
    %c0_4 = arith.constant 0 : index
    %12 = vector.load %arg3[%c0_3, %c0_4] : memref<8x128xf32, #tpu.memory_space<vmem>>, vector<8x128xf32>
    tpu.vector_store %arg3[%c0_3, %c0_4], %11 {strides = array<i32>} : memref<8x128xf32, #tpu.memory_space<vmem>>, vector<8x128xf32>,
    return
  }
  func.func @transform_0(%arg0: i32) -> (i32, i32) {
    %c0_i32 = arith.constant 0 : i32
    %c0_i32_0 = arith.constant 0 : i32
    return %arg0, %c0_i32 : i32, i32
  }
  func.func @transform_1(%arg0: i32) -> (i32, i32) {
    %c0_i32 = arith.constant 0 : i32
    %c0_i32_0 = arith.constant 0 : i32
    %c0_i32_1 = arith.constant 0 : i32
    return %c0_i32, %c0_i32_0 : i32, i32
  }
  func.func @transform_2(%arg0: i32) -> (i32, i32) {
    %c0_i32 = arith.constant 0 : i32
    %c0_i32_0 = arith.constant 0 : i32
    return %arg0, %c0_i32 : i32, i32
  }
}

</mosaic_0001>

<llo_original>
// kernel: tpu_custom_call.1
$region0: #{tpu_custom_call.1}
  #allocation0 [shape = 'u32[]', space=smem, size = 0x4, offset = 0x4, fixed_abs, tag = 'smem constant byte address 0x4 - core index']
  #allocation1 [shape = 'u32[144,128]{1,0:T(1,128)}', space=vmem, size = 0x12000, scoped, tag = 'internal scratch']
  %s0 = inlined_call_operand.vmem [shape: s32[16,1], index: 0, kind: input, shape index: {}]
  %s1 = inlined_call_operand.hbm [shape: f32[128,128], index: 1, kind: input, shape index: {}]
  %s2 = inlined_call_operand.hbm [shape: f32[16,128], index: 2, kind: output, shape index: {}]
  %s3 = sld [smem:[#allocation0]]
  $region45: #{tpu_custom_call.1} parent=0
    _
  %s5 = ssub.s32 1, %s3
  %s6 = scalar_select 0, %s5, %s3
  $region1: #{tpu_custom_call.1} parent=0
    #allocation2 [shape = 'u8[65536]{0}', space=vmem, size = 0x10000, scoped, tag = 'input window, operand 1, single buffered']
    #allocation3 [shape = 's32[2]{0}', space=sflag, size = 0x8, scoped, tag = 'scoped memory for tpu_custom_call.1']
    #allocation4 [shape = 's32[2]{0}', space=sflag, size = 0x8, scoped, tag = 'scoped memory for tpu_custom_call.1']
    #allocation5 [shape = 'u8[8192]{0}', space=vmem, size = 0x2000, scoped, tag = 'output window, operand 0']
    %7 = vsyncpa [#allocation3], 0
    %8 = vsyncpa [#allocation4], 0
    %s9 = scalar_lea.sflag [#allocation4], 1
    %10 = vsyncpa %s9, 0
    loop: start=0, step=1, limit=4
    $region2: #{tpu_custom_call.1} parent=1 // loop_pre_header
      _
    $region3: #{tpu_custom_call.1} parent=1 // loop_header
      %s12 = sphi 0, %s16
      %p13 = scmp.ge.s32.totalorder %s12, 4
      %s22 = sphi 0, %s24
      %s25 = sphi 0, %s22
      %s26 = sphi 0, %s25
      %s42 = sphi 0, %s26
      %s46 = sphi 0, %s46
      %s48 = sphi 0, %s46
      %s49 = sphi 0, %s48
      %s63 = sphi 0, %s49
      %s69 = sphi 0, %s71
      %s72 = sphi 0, %s69
      %s73 = sphi 0, %s72
      %s89 = sphi 0, %s73
    $region4: #{tpu_custom_call.1} parent=1 // loop_header_branch
      %15 = sbr.rel (%p13) target = $region8
    $region5: #{tpu_custom_call.1} parent=1 // loop_body
      %s17 = ssub.s32 %s12, 1
      %s18 = ssub.s32 %s12, 2
      %s19 = sadd.s32 %s12, 1
      %s20 = ssub.s32 %s12, %s19
      %p21 = scmp.eq.s32.totalorder %s20, 0
      %s23 = sadd.s32 %s22, 1
      %s24 = scalar_select %p21, %s22, %s23
      %p27 = pneg %p21
      %p28 = scmp.eq.s32.totalorder %s12, 1
      %p29 = por %p27, %p28
      %p30 = scmp.ne.s32.totalorder %s22, %s25
      %p31 = scmp.eq.s32.totalorder %s12, 0
      %p32 = por %p30, %p31
      %p33 = scmp.ne.s32.totalorder %s22, %s25
      %p34 = scmp.eq.s32.totalorder %s17, 1
      %p35 = por %p33, %p34
      %p36 = scmp.ne.s32.totalorder %s25, %s26
      %p37 = scmp.eq.s32.totalorder %s17, 0
      %p38 = por %p36, %p37
      %p39 = scmp.ne.s32.totalorder %s25, %s26
      %p40 = scmp.eq.s32.totalorder %s18, 1
      %p41 = por %p39, %p40
      %p43 = scmp.ne.s32.totalorder %s26, %s42
      %p44 = scmp.eq.s32.totalorder %s18, 0
      %p45 = por %p43, %p44
      %s47 = sadd.s32 %s46, 1
      %p50 = scmp.eq.s32.totalorder %s12, 1
      %p51 = scmp.ne.s32.totalorder %s46, %s48
      %p52 = scmp.eq.s32.totalorder %s12, 0
      %p53 = por %p51, %p52
      %p54 = scmp.ne.s32.totalorder %s46, %s48
      %p55 = scmp.eq.s32.totalorder %s17, 1
      %p56 = por %p54, %p55
      %p57 = scmp.ne.s32.totalorder %s48, %s49
      %p58 = scmp.eq.s32.totalorder %s17, 0
      %p59 = por %p57, %p58
      %p60 = scmp.ne.s32.totalorder %s48, %s49
      %p61 = scmp.eq.s32.totalorder %s18, 1
      %p62 = por %p60, %p61
      %p64 = scmp.ne.s32.totalorder %s49, %s63
      %p65 = scmp.eq.s32.totalorder %s18, 0
      %p66 = por %p64, %p65
      %s67 = ssub.s32 %s12, %s19
      %p68 = scmp.eq.s32.totalorder %s67, 0
      %s70 = sadd.s32 %s69, 1
      %s71 = scalar_select %p68, %s69, %s70
      %p74 = pneg %p68
      %p75 = scmp.eq.s32.totalorder %s12, 1
      %p76 = por %p74, %p75
      %p77 = scmp.ne.s32.totalorder %s69, %s72
      %p78 = scmp.eq.s32.totalorder %s12, 0
      %p79 = por %p77, %p78
      %p80 = scmp.ne.s32.totalorder %s69, %s72
      %p81 = scmp.eq.s32.totalorder %s17, 1
      %p82 = por %p80, %p81
      %p83 = scmp.ne.s32.totalorder %s72, %s73
      %p84 = scmp.eq.s32.totalorder %s17, 0
      %p85 = por %p83, %p84
      %p86 = scmp.ne.s32.totalorder %s72, %s73
      %p87 = scmp.eq.s32.totalorder %s18, 1
      %p88 = por %p86, %p87
      %p90 = scmp.ne.s32.totalorder %s73, %s89
      %p91 = scmp.eq.s32.totalorder %s18, 0
      %p92 = por %p90, %p91
      %p93 = scmp.le.s32.totalorder 1, %s12
      %p94 = scmp.lt.s32.totalorder %s12, 3
      %p95 = pnand %p93, %p94
      %p96 = pneg %p95
      // Predicated region
      $region9: #{tpu_custom_call.1} parent=5 // pred_check
        _
      $region10: #{tpu_custom_call.1} parent=5 // pred_check_branch
        %98 = sbr.rel (%p95) target = $region12
      $region11: #{tpu_custom_call.1} parent=5 // pred_region
        %s99 = ssub.s32 %s12, 1
        // Predicated region
        $region13: #{tpu_custom_call.1} parent=11 // pred_check
          %p100 = pneg %p59
        $region14: #{tpu_custom_call.1} parent=11 // pred_check_branch
          %102 = sbr.rel (%p100) target = $region16
        $region15: #{tpu_custom_call.1} parent=11 // pred_region
          %s104 = ssub.s32 2048, 2048
          %105 = vsyncadd [#allocation3], %s104
          %s106 = sshll.u32 [#allocation2], 4
          %s107 = int_to_ptr.vmem [resolvable:$true] %s106
          %112 = dma.hbm_to_vmem [thread:$0]  %s1, 2048, %s107, [#allocation3], 128, 128, 8
        $region16: #{tpu_custom_call.1} parent=11 // pred_fallthru
          _
      $region12: #{tpu_custom_call.1} parent=5 // pred_fallthru
        _
      %p113 = scmp.lt.s32.totalorder %s12, 2
      // Predicated region
      $region17: #{tpu_custom_call.1} parent=5 // pred_check
        %p114 = pneg %p113
      $region18: #{tpu_custom_call.1} parent=5 // pred_check_branch
        %116 = sbr.rel (%p114) target = $region20
      $region19: #{tpu_custom_call.1} parent=5 // pred_region
        // Predicated region
        $region21: #{tpu_custom_call.1} parent=19 // pred_check
          %p117 = pneg %p32
        $region22: #{tpu_custom_call.1} parent=19 // pred_check_branch
          %119 = sbr.rel (%p117) target = $region24
        $region23: #{tpu_custom_call.1} parent=19 // pred_region
          %p120 = scmp.lt.s32.totalorder %s12, 1
          %s121 = scalar_select %p120, %s12, 1
          %s122 = smul.addr %s121, 8
          %s123 = scalar_lea.vmem %s0, %s122
        $region24: #{tpu_custom_call.1} parent=19 // pred_fallthru
          _
      $region20: #{tpu_custom_call.1} parent=5 // pred_fallthru
        _
      %p124 = scmp.le.s32.totalorder 1, %s12
      %p125 = scmp.lt.s32.totalorder %s12, 3
      %p126 = pnand %p124, %p125
      %p127 = pneg %p126
      // Predicated region
      $region25: #{tpu_custom_call.1} parent=5 // pred_check
        _
      $region26: #{tpu_custom_call.1} parent=5 // pred_check_branch
        %129 = sbr.rel (%p126) target = $region28
      $region27: #{tpu_custom_call.1} parent=5 // pred_region
        %s130 = ssub.s32 %s12, 1
        // Predicated region
        $region29: #{tpu_custom_call.1} parent=27 // pred_check
          %p131 = pneg %p59
        $region30: #{tpu_custom_call.1} parent=27 // pred_check_branch
          %133 = sbr.rel (%p131) target = $region32
        $region31: #{tpu_custom_call.1} parent=27 // pred_region
          %134 = dma.done [#allocation3], 2048
        $region32: #{tpu_custom_call.1} parent=27 // pred_fallthru
          _
        %p135 = scmp.lt.s32.totalorder %s17, 1
        %s136 = scalar_select %p135, %s17, 1
        %s137 = smul.addr %s136, 8
        %s138 = scalar_lea.vmem %s0, %s137
        %p139 = pneg %p38
        %p140 = pneg %p35
        %p141 = pneg %p59
        %p142 = pneg %p56
        %p143 = pneg %p85
        %p144 = pneg %p82
        %s145 = sand.u32 %s72, 1
        %s146 = scalar_lea.sflag [#allocation4], %s145
        %s147 = sand.u32 %s72, 1
        %s148 = smul.addr %s147, 8
        %s149 = scalar_lea.vmem [#allocation5], %s148
        %p150 = scmp.lt.s32.totalorder %s17, 1
        %s151 = scalar_select %p150, %s17, 1
        %s152 = smul.addr %s151, 8
        %s153 = scalar_lea.vmem %s0, %s152
        %v154 = vld [vmem:[%s153] sm:$0xff]
        %vm155 = vcmp.gt.s32.totalorder %v154, 0
        %v156 = vsel %vm155, %v154, 0
        %vm157 = vcmp.lt.s32.totalorder %v156, 127
        %v158 = vsel %vm157, %v156, 127
        %v159 = vlaneseq
        %v160 = vand.u32 %v159, 127
        %161 = vset.pattern.permute.xlu0 0
        %162 = vperm.xlu0 %161, %v158
        %v163 = vpop.permute.xlu0 %162
        %vm164 = vcmp.eq.s32.totalorder %v160, %v163
        %v165 = vsel %vm164, 1, 0
        %v166 = vcvt.s32.f32 %v165
        %v167 = vld [vmem:[#allocation2] sm:$0xff]
        %v168 = vld [vmem:[#allocation2 + $0x8] sm:$0xff]
        %v169 = vld [vmem:[#allocation2 + $0x10] sm:$0xff]
        %v170 = vld [vmem:[#allocation2 + $0x18] sm:$0xff]
        %v171 = vld [vmem:[#allocation2 + $0x20] sm:$0xff]
        %v172 = vld [vmem:[#allocation2 + $0x28] sm:$0xff]
        %v173 = vld [vmem:[#allocation2 + $0x30] sm:$0xff]
        %v174 = vld [vmem:[#allocation2 + $0x38] sm:$0xff]
        %v175 = vld [vmem:[#allocation2 + $0x40] sm:$0xff]
        %v176 = vld [vmem:[#allocation2 + $0x48] sm:$0xff]
        %v177 = vld [vmem:[#allocation2 + $0x50] sm:$0xff]
        %v178 = vld [vmem:[#allocation2 + $0x58] sm:$0xff]
        %v179 = vld [vmem:[#allocation2 + $0x60] sm:$0xff]
        %v180 = vld [vmem:[#allocation2 + $0x68] sm:$0xff]
        %v181 = vld [vmem:[#allocation2 + $0x70] sm:$0xff]
        %v182 = vld [vmem:[#allocation2 + $0x78] sm:$0xff]
        %183 = vmatprep.subr.mxu0 0.0
        %v184 = vand.u32 %v167, 4294901760
        %185 = vmatpush1.msra.mxu0 %v184
        %186 = vmatprep.subr.mxu0 0.0
        %v187 = vand.u32 %v168, 4294901760
        %188 = vmatpush1.msra.mxu0 %v187
        %189 = vmatprep.subr.mxu0 0.0
        %v190 = vand.u32 %v169, 4294901760
        %191 = vmatpush1.msra.mxu0 %v190
        %192 = vmatprep.subr.mxu0 0.0
        %v193 = vand.u32 %v170, 4294901760
        %194 = vmatpush1.msra.mxu0 %v193
        %195 = vmatprep.subr.mxu0 0.0
        %v196 = vand.u32 %v171, 4294901760
        %197 = vmatpush1.msra.mxu0 %v196
        %198 = vmatprep.subr.mxu0 0.0
        %v199 = vand.u32 %v172, 4294901760
        %200 = vmatpush1.msra.mxu0 %v199
        %201 = vmatprep.subr.mxu0 0.0
        %v202 = vand.u32 %v173, 4294901760
        %203 = vmatpush1.msra.mxu0 %v202
        %204 = vmatprep.subr.mxu0 0.0
        %v205 = vand.u32 %v174, 4294901760
        %206 = vmatpush1.msra.mxu0 %v205
        %207 = vmatprep.subr.mxu0 0.0
        %v208 = vand.u32 %v175, 4294901760
        %209 = vmatpush1.msra.mxu0 %v208
        %210 = vmatprep.subr.mxu0 0.0
        %v211 = vand.u32 %v176, 4294901760
        %212 = vmatpush1.msra.mxu0 %v211
        %213 = vmatprep.subr.mxu0 0.0
        %v214 = vand.u32 %v177, 4294901760
        %215 = vmatpush1.msra.mxu0 %v214
        %216 = vmatprep.subr.mxu0 0.0
        %v217 = vand.u32 %v178, 4294901760
        %218 = vmatpush1.msra.mxu0 %v217
        %219 = vmatprep.subr.mxu0 0.0
        %v220 = vand.u32 %v179, 4294901760
        %221 = vmatpush1.msra.mxu0 %v220
        %222 = vmatprep.subr.mxu0 0.0
        %v223 = vand.u32 %v180, 4294901760
        %224 = vmatpush1.msra.mxu0 %v223
        %225 = vmatprep.subr.mxu0 0.0
        %v226 = vand.u32 %v181, 4294901760
        %227 = vmatpush1.msra.mxu0 %v226
        %228 = vmatprep.subr.mxu0 0.0
        %v229 = vand.u32 %v182, 4294901760
        %230 = vmatpush1.msra.mxu0 %v229
        %231 = vmatprep.subr.mxu0 0.0
        %232 = vmatpush1.msra.mxu0 0.0
        %233 = vmatprep.subr.mxu0 0.0
        %234 = vmatpush1.msra.mxu0 0.0
        %235 = vmatprep.subr.mxu0 0.0
        %236 = vmatpush1.msra.mxu0 0.0
        %237 = vmatprep.subr.mxu0 0.0
        %238 = vmatpush1.msra.mxu0 0.0
        %239 = vmatprep.subr.mxu0 0.0
        %240 = vmatpush1.msra.mxu0 0.0
        %241 = vmatprep.subr.mxu0 0.0
        %242 = vmatpush1.msra.mxu0 0.0
        %243 = vmatprep.subr.mxu0 0.0
        %244 = vmatpush1.msra.mxu0 0.0
        %245 = vmatprep.subr.mxu0 0.0
        %246 = vmatpush1.msra.mxu0 0.0
        %247 = vmatprep.subr.mxu0 0.0
        %248 = vmatpush1.msra.mxu0 0.0
        %249 = vmatprep.subr.mxu0 0.0
        %250 = vmatpush1.msra.mxu0 0.0
        %251 = vmatprep.subr.mxu0 0.0
        %252 = vmatpush1.msra.mxu0 0.0
        %253 = vmatprep.subr.mxu0 0.0
        %254 = vmatpush1.msra.mxu0 0.0
        %255 = vmatprep.subr.mxu0 0.0
        %256 = vmatpush1.msra.mxu0 0.0
        %257 = vmatprep.subr.mxu0 0.0
        %258 = vmatpush1.msra.mxu0 0.0
        %259 = vmatprep.subr.mxu0 0.0
        %260 = vmatpush1.msra.mxu0 0.0
        %261 = vmatprep.subr.mxu0 0.0
        %262 = vmatpush1.msra.mxu0 0.0
        %263 = vmatprep.mubr.f32.mxu0 0.0
        %v264 = vand.u32 %v166, 4294901760
        %v265 = vsub.f32 %v166, %v264
        %v266 = vand.u32 %v265, 4294901760
        %v267 = vsub.f32 %v265, %v266
        %v268 = vand.u32 %v267, 4294901760
        %269 = vmatmul.mubr.f32.gmra.mrb[0].mxu0 %v268
        %v270 = vpop.f32.mrb[0].mxu0
        %v271 = vadd.f32 0.0, %v270
        %v272 = vpop.f32.mrb[0].mxu0
        %273 = vdwg.mxu0
        %274 = vmatprep.subr.mxu0 0.0
        %v275 = vand.u32 %v167, 4294901760
        %v276 = vsub.f32 %v167, %v275
        %v277 = vand.u32 %v276, 4294901760
        %v278 = vsub.f32 %v276, %v277
        %v279 = vand.u32 %v278, 4294901760
        %280 = vmatpush1.msra.mxu0 %v279
        %281 = vmatprep.subr.mxu0 0.0
        %v282 = vand.u32 %v168, 4294901760
        %v283 = vsub.f32 %v168, %v282
        %v284 = vand.u32 %v283, 4294901760
        %v285 = vsub.f32 %v283, %v284
        %v286 = vand.u32 %v285, 4294901760
        %287 = vmatpush1.msra.mxu0 %v286
        %288 = vmatprep.subr.mxu0 0.0
        %v289 = vand.u32 %v169, 4294901760
        %v290 = vsub.f32 %v169, %v289
        %v291 = vand.u32 %v290, 4294901760
        %v292 = vsub.f32 %v290, %v291
        %v293 = vand.u32 %v292, 4294901760
        %294 = vmatpush1.msra.mxu0 %v293
        %295 = vmatprep.subr.mxu0 0.0
        %v296 = vand.u32 %v170, 4294901760
        %v297 = vsub.f32 %v170, %v296
        %v298 = vand.u32 %v297, 4294901760
        %v299 = vsub.f32 %v297, %v298
        %v300 = vand.u32 %v299, 4294901760
        %301 = vmatpush1.msra.mxu0 %v300
        %302 = vmatprep.subr.mxu0 0.0
        %v303 = vand.u32 %v171, 4294901760
        %v304 = vsub.f32 %v171, %v303
        %v305 = vand.u32 %v304, 4294901760
        %v306 = vsub.f32 %v304, %v305
        %v307 = vand.u32 %v306, 4294901760
        %308 = vmatpush1.msra.mxu0 %v307
        %309 = vmatprep.subr.mxu0 0.0
        %v310 = vand.u32 %v172, 4294901760
        %v311 = vsub.f32 %v172, %v310
        %v312 = vand.u32 %v311, 4294901760
        %v313 = vsub.f32 %v311, %v312
        %v314 = vand.u32 %v313, 4294901760
        %315 = vmatpush1.msra.mxu0 %v314
        %316 = vmatprep.subr.mxu0 0.0
        %v317 = vand.u32 %v173, 4294901760
        %v318 = vsub.f32 %v173, %v317
        %v319 = vand.u32 %v318, 4294901760
        %v320 = vsub.f32 %v318, %v319
        %v321 = vand.u32 %v320, 4294901760
        %322 = vmatpush1.msra.mxu0 %v321
        %323 = vmatprep.subr.mxu0 0.0
        %v324 = vand.u32 %v174, 4294901760
        %v325 = vsub.f32 %v174, %v324
        %v326 = vand.u32 %v325, 4294901760
        %v327 = vsub.f32 %v325, %v326
        %v328 = vand.u32 %v327, 4294901760
        %329 = vmatpush1.msra.mxu0 %v328
        %330 = vmatprep.subr.mxu0 0.0
        %v331 = vand.u32 %v175, 4294901760
        %v332 = vsub.f32 %v175, %v331
        %v333 = vand.u32 %v332, 4294901760
        %v334 = vsub.f32 %v332, %v333
        %v335 = vand.u32 %v334, 4294901760
        %336 = vmatpush1.msra.mxu0 %v335
        %337 = vmatprep.subr.mxu0 0.0
        %v338 = vand.u32 %v176, 4294901760
        %v339 = vsub.f32 %v176, %v338
        %v340 = vand.u32 %v339, 4294901760
        %v341 = vsub.f32 %v339, %v340
        %v342 = vand.u32 %v341, 4294901760
        %343 = vmatpush1.msra.mxu0 %v342
        %344 = vmatprep.subr.mxu0 0.0
        %v345 = vand.u32 %v177, 4294901760
        %v346 = vsub.f32 %v177, %v345
        %v347 = vand.u32 %v346, 4294901760
        %v348 = vsub.f32 %v346, %v347
        %v349 = vand.u32 %v348, 4294901760
        %350 = vmatpush1.msra.mxu0 %v349
        %351 = vmatprep.subr.mxu0 0.0
        %v352 = vand.u32 %v178, 4294901760
        %v353 = vsub.f32 %v178, %v352
        %v354 = vand.u32 %v353, 4294901760
        %v355 = vsub.f32 %v353, %v354
        %v356 = vand.u32 %v355, 4294901760
        %357 = vmatpush1.msra.mxu0 %v356
        %358 = vmatprep.subr.mxu0 0.0
        %v359 = vand.u32 %v179, 4294901760
        %v360 = vsub.f32 %v179, %v359
        %v361 = vand.u32 %v360, 4294901760
        %v362 = vsub.f32 %v360, %v361
        %v363 = vand.u32 %v362, 4294901760
        %364 = vmatpush1.msra.mxu0 %v363
        %365 = vmatprep.subr.mxu0 0.0
        %v366 = vand.u32 %v180, 4294901760
        %v367 = vsub.f32 %v180, %v366
        %v368 = vand.u32 %v367, 4294901760
        %v369 = vsub.f32 %v367, %v368
        %v370 = vand.u32 %v369, 4294901760
        %371 = vmatpush1.msra.mxu0 %v370
        %372 = vmatprep.subr.mxu0 0.0
        %v373 = vand.u32 %v181, 4294901760
        %v374 = vsub.f32 %v181, %v373
        %v375 = vand.u32 %v374, 4294901760
        %v376 = vsub.f32 %v374, %v375
        %v377 = vand.u32 %v376, 4294901760
        %378 = vmatpush1.msra.mxu0 %v377
        %379 = vmatprep.subr.mxu0 0.0
        %v380 = vand.u32 %v182, 4294901760
        %v381 = vsub.f32 %v182, %v380
        %v382 = vand.u32 %v381, 4294901760
        %v383 = vsub.f32 %v381, %v382
        %v384 = vand.u32 %v383, 4294901760
        %385 = vmatpush1.msra.mxu0 %v384
        %386 = vmatprep.subr.mxu0 0.0
        %387 = vmatpush1.msra.mxu0 0.0
        %388 = vmatprep.subr.mxu0 0.0
        %389 = vmatpush1.msra.mxu0 0.0
        %390 = vmatprep.subr.mxu0 0.0
        %391 = vmatpush1.msra.mxu0 0.0
        %392 = vmatprep.subr.mxu0 0.0
        %393 = vmatpush1.msra.mxu0 0.0
        %394 = vmatprep.subr.mxu0 0.0
        %395 = vmatpush1.msra.mxu0 0.0
        %396 = vmatprep.subr.mxu0 0.0
        %397 = vmatpush1.msra.mxu0 0.0
        %398 = vmatprep.subr.mxu0 0.0
        %399 = vmatpush1.msra.mxu0 0.0
        %400 = vmatprep.subr.mxu0 0.0
        %401 = vmatpush1.msra.mxu0 0.0
        %402 = vmatprep.subr.mxu0 0.0
        %403 = vmatpush1.msra.mxu0 0.0
        %404 = vmatprep.subr.mxu0 0.0
        %405 = vmatpush1.msra.mxu0 0.0
        %406 = vmatprep.subr.mxu0 0.0
        %407 = vmatpush1.msra.mxu0 0.0
        %408 = vmatprep.subr.mxu0 0.0
        %409 = vmatpush1.msra.mxu0 0.0
        %410 = vmatprep.subr.mxu0 0.0
        %411 = vmatpush1.msra.mxu0 0.0
        %412 = vmatprep.subr.mxu0 0.0
        %413 = vmatpush1.msra.mxu0 0.0
        %414 = vmatprep.subr.mxu0 0.0
        %415 = vmatpush1.msra.mxu0 0.0
        %416 = vmatprep.subr.mxu0 0.0
        %417 = vmatpush1.msra.mxu0 0.0
        %418 = vmatprep.mubr.f32.mxu0 0.0
        %v419 = vand.u32 %v166, 4294901760
        %420 = vmatmul.mubr.f32.gmra.mrb[0].mxu0 %v419
        %v421 = vpop.f32.mrb[0].mxu0
        %v422 = vadd.f32 %v271, %v421
        %v423 = vpop.f32.mrb[0].mxu0
        %424 = vdwg.mxu0
        %425 = vmatprep.subr.mxu0 0.0
        %v426 = vand.u32 %v167, 4294901760
        %v427 = vsub.f32 %v167, %v426
        %428 = vmatpush1.msra.mxu0 %v427
        %429 = vmatprep.subr.mxu0 0.0
        %v430 = vand.u32 %v168, 4294901760
        %v431 = vsub.f32 %v168, %v430
        %432 = vmatpush1.msra.mxu0 %v431
        %433 = vmatprep.subr.mxu0 0.0
        %v434 = vand.u32 %v169, 4294901760
        %v435 = vsub.f32 %v169, %v434
        %436 = vmatpush1.msra.mxu0 %v435
        %437 = vmatprep.subr.mxu0 0.0
        %v438 = vand.u32 %v170, 4294901760
        %v439 = vsub.f32 %v170, %v438
        %440 = vmatpush1.msra.mxu0 %v439
        %441 = vmatprep.subr.mxu0 0.0
        %v442 = vand.u32 %v171, 4294901760
        %v443 = vsub.f32 %v171, %v442
        %444 = vmatpush1.msra.mxu0 %v443
        %445 = vmatprep.subr.mxu0 0.0
        %v446 = vand.u32 %v172, 4294901760
        %v447 = vsub.f32 %v172, %v446
        %448 = vmatpush1.msra.mxu0 %v447
        %449 = vmatprep.subr.mxu0 0.0
        %v450 = vand.u32 %v173, 4294901760
        %v451 = vsub.f32 %v173, %v450
        %452 = vmatpush1.msra.mxu0 %v451
        %453 = vmatprep.subr.mxu0 0.0
        %v454 = vand.u32 %v174, 4294901760
        %v455 = vsub.f32 %v174, %v454
        %456 = vmatpush1.msra.mxu0 %v455
        %457 = vmatprep.subr.mxu0 0.0
        %v458 = vand.u32 %v175, 4294901760
        %v459 = vsub.f32 %v175, %v458
        %460 = vmatpush1.msra.mxu0 %v459
        %461 = vmatprep.subr.mxu0 0.0
        %v462 = vand.u32 %v176, 4294901760
        %v463 = vsub.f32 %v176, %v462
        %464 = vmatpush1.msra.mxu0 %v463
        %465 = vmatprep.subr.mxu0 0.0
        %v466 = vand.u32 %v177, 4294901760
        %v467 = vsub.f32 %v177, %v466
        %468 = vmatpush1.msra.mxu0 %v467
        %469 = vmatprep.subr.mxu0 0.0
        %v470 = vand.u32 %v178, 4294901760
        %v471 = vsub.f32 %v178, %v470
        %472 = vmatpush1.msra.mxu0 %v471
        %473 = vmatprep.subr.mxu0 0.0
        %v474 = vand.u32 %v179, 4294901760
        %v475 = vsub.f32 %v179, %v474
        %476 = vmatpush1.msra.mxu0 %v475
        %477 = vmatprep.subr.mxu0 0.0
        %v478 = vand.u32 %v180, 4294901760
        %v479 = vsub.f32 %v180, %v478
        %480 = vmatpush1.msra.mxu0 %v479
        %481 = vmatprep.subr.mxu0 0.0
        %v482 = vand.u32 %v181, 4294901760
        %v483 = vsub.f32 %v181, %v482
        %484 = vmatpush1.msra.mxu0 %v483
        %485 = vmatprep.subr.mxu0 0.0
        %v486 = vand.u32 %v182, 4294901760
        %v487 = vsub.f32 %v182, %v486
        %488 = vmatpush1.msra.mxu0 %v487
        %489 = vmatprep.subr.mxu0 0.0
        %490 = vmatpush1.msra.mxu0 0.0
        %491 = vmatprep.subr.mxu0 0.0
        %492 = vmatpush1.msra.mxu0 0.0
        %493 = vmatprep.subr.mxu0 0.0
        %494 = vmatpush1.msra.mxu0 0.0
        %495 = vmatprep.subr.mxu0 0.0
        %496 = vmatpush1.msra.mxu0 0.0
        %497 = vmatprep.subr.mxu0 0.0
        %498 = vmatpush1.msra.mxu0 0.0
        %499 = vmatprep.subr.mxu0 0.0
        %500 = vmatpush1.msra.mxu0 0.0
        %501 = vmatprep.subr.mxu0 0.0
        %502 = vmatpush1.msra.mxu0 0.0
        %503 = vmatprep.subr.mxu0 0.0
        %504 = vmatpush1.msra.mxu0 0.0
        %505 = vmatprep.subr.mxu0 0.0
        %506 = vmatpush1.msra.mxu0 0.0
        %507 = vmatprep.subr.mxu0 0.0
        %508 = vmatpush1.msra.mxu0 0.0
        %509 = vmatprep.subr.mxu0 0.0
        %510 = vmatpush1.msra.mxu0 0.0
        %511 = vmatprep.subr.mxu0 0.0
        %512 = vmatpush1.msra.mxu0 0.0
        %513 = vmatprep.subr.mxu0 0.0
        %514 = vmatpush1.msra.mxu0 0.0
        %515 = vmatprep.subr.mxu0 0.0
        %516 = vmatpush1.msra.mxu0 0.0
        %517 = vmatprep.subr.mxu0 0.0
        %518 = vmatpush1.msra.mxu0 0.0
        %519 = vmatprep.subr.mxu0 0.0
        %520 = vmatpush1.msra.mxu0 0.0
        %521 = vmatprep.mubr.f32.mxu0 0.0
        %v522 = vand.u32 %v166, 4294901760
        %v523 = vsub.f32 %v166, %v522
        %524 = vmatmul.mubr.f32.gmra.mrb[0].mxu0 %v523
        %v525 = vpop.f32.mrb[0].mxu0
        %v526 = vadd.f32 %v422, %v525
        %v527 = vpop.f32.mrb[0].mxu0
        %528 = vdwg.mxu0
        %529 = vmatprep.subr.mxu0 0.0
        %v530 = vand.u32 %v167, 4294901760
        %531 = vmatpush1.msra.mxu0 %v530
        %532 = vmatprep.subr.mxu0 0.0
        %v533 = vand.u32 %v168, 4294901760
        %534 = vmatpush1.msra.mxu0 %v533
        %535 = vmatprep.subr.mxu0 0.0
        %v536 = vand.u32 %v169, 4294901760
        %537 = vmatpush1.msra.mxu0 %v536
        %538 = vmatprep.subr.mxu0 0.0
        %v539 = vand.u32 %v170, 4294901760
        %540 = vmatpush1.msra.mxu0 %v539
        %541 = vmatprep.subr.mxu0 0.0
        %v542 = vand.u32 %v171, 4294901760
        %543 = vmatpush1.msra.mxu0 %v542
        %544 = vmatprep.subr.mxu0 0.0
        %v545 = vand.u32 %v172, 4294901760
        %546 = vmatpush1.msra.mxu0 %v545
        %547 = vmatprep.subr.mxu0 0.0
        %v548 = vand.u32 %v173, 4294901760
        %549 = vmatpush1.msra.mxu0 %v548
        %550 = vmatprep.subr.mxu0 0.0
        %v551 = vand.u32 %v174, 4294901760
        %552 = vmatpush1.msra.mxu0 %v551
        %553 = vmatprep.subr.mxu0 0.0
        %v554 = vand.u32 %v175, 4294901760
        %555 = vmatpush1.msra.mxu0 %v554
        %556 = vmatprep.subr.mxu0 0.0
        %v557 = vand.u32 %v176, 4294901760
        %558 = vmatpush1.msra.mxu0 %v557
        %559 = vmatprep.subr.mxu0 0.0
        %v560 = vand.u32 %v177, 4294901760
        %561 = vmatpush1.msra.mxu0 %v560
        %562 = vmatprep.subr.mxu0 0.0
        %v563 = vand.u32 %v178, 4294901760
        %564 = vmatpush1.msra.mxu0 %v563
        %565 = vmatprep.subr.mxu0 0.0
        %v566 = vand.u32 %v179, 4294901760
        %567 = vmatpush1.msra.mxu0 %v566
        %568 = vmatprep.subr.mxu0 0.0
        %v569 = vand.u32 %v180, 4294901760
        %570 = vmatpush1.msra.mxu0 %v569
        %571 = vmatprep.subr.mxu0 0.0
        %v572 = vand.u32 %v181, 4294901760
        %573 = vmatpush1.msra.mxu0 %v572
        %574 = vmatprep.subr.mxu0 0.0
        %v575 = vand.u32 %v182, 4294901760
        %576 = vmatpush1.msra.mxu0 %v575
        %577 = vmatprep.subr.mxu0 0.0
        %578 = vmatpush1.msra.mxu0 0.0
        %579 = vmatprep.subr.mxu0 0.0
        %580 = vmatpush1.msra.mxu0 0.0
        %581 = vmatprep.subr.mxu0 0.0
        %582 = vmatpush1.msra.mxu0 0.0
        %583 = vmatprep.subr.mxu0 0.0
        %584 = vmatpush1.msra.mxu0 0.0
        %585 = vmatprep.subr.mxu0 0.0
        %586 = vmatpush1.msra.mxu0 0.0
        %587 = vmatprep.subr.mxu0 0.0
        %588 = vmatpush1.msra.mxu0 0.0
        %589 = vmatprep.subr.mxu0 0.0
        %590 = vmatpush1.msra.mxu0 0.0
        %591 = vmatprep.subr.mxu0 0.0
        %592 = vmatpush1.msra.mxu0 0.0
        %593 = vmatprep.subr.mxu0 0.0
        %594 = vmatpush1.msra.mxu0 0.0
        %595 = vmatprep.subr.mxu0 0.0
        %596 = vmatpush1.msra.mxu0 0.0
        %597 = vmatprep.subr.mxu0 0.0
        %598 = vmatpush1.msra.mxu0 0.0
        %599 = vmatprep.subr.mxu0 0.0
        %600 = vmatpush1.msra.mxu0 0.0
        %601 = vmatprep.subr.mxu0 0.0
        %602 = vmatpush1.msra.mxu0 0.0
        %603 = vmatprep.subr.mxu0 0.0
        %604 = vmatpush1.msra.mxu0 0.0
        %605 = vmatprep.subr.mxu0 0.0
        %606 = vmatpush1.msra.mxu0 0.0
        %607 = vmatprep.subr.mxu0 0.0
        %608 = vmatpush1.msra.mxu0 0.0
        %609 = vmatprep.mubr.f32.mxu0 0.0
        %v610 = vand.u32 %v166, 4294901760
        %v611 = vsub.f32 %v166, %v610
        %v612 = vand.u32 %v611, 4294901760
        %613 = vmatmul.mubr.f32.gmra.mrb[0].mxu0 %v612
        %v614 = vpop.f32.mrb[0].mxu0
        %v615 = vadd.f32 %v526, %v614
        %v616 = vpop.f32.mrb[0].mxu0
        %617 = vdwg.mxu0
        %618 = vmatprep.subr.mxu0 0.0
        %v619 = vand.u32 %v167, 4294901760
        %v620 = vsub.f32 %v167, %v619
        %v621 = vand.u32 %v620, 4294901760
        %622 = vmatpush1.msra.mxu0 %v621
        %623 = vmatprep.subr.mxu0 0.0
        %v624 = vand.u32 %v168, 4294901760
        %v625 = vsub.f32 %v168, %v624
        %v626 = vand.u32 %v625, 4294901760
        %627 = vmatpush1.msra.mxu0 %v626
        %628 = vmatprep.subr.mxu0 0.0
        %v629 = vand.u32 %v169, 4294901760
        %v630 = vsub.f32 %v169, %v629
        %v631 = vand.u32 %v630, 4294901760
        %632 = vmatpush1.msra.mxu0 %v631
        %633 = vmatprep.subr.mxu0 0.0
        %v634 = vand.u32 %v170, 4294901760
        %v635 = vsub.f32 %v170, %v634
        %v636 = vand.u32 %v635, 4294901760
        %637 = vmatpush1.msra.mxu0 %v636
        %638 = vmatprep.subr.mxu0 0.0
        %v639 = vand.u32 %v171, 4294901760
        %v640 = vsub.f32 %v171, %v639
        %v641 = vand.u32 %v640, 4294901760
        %642 = vmatpush1.msra.mxu0 %v641
        %643 = vmatprep.subr.mxu0 0.0
        %v644 = vand.u32 %v172, 4294901760
        %v645 = vsub.f32 %v172, %v644
        %v646 = vand.u32 %v645, 4294901760
        %647 = vmatpush1.msra.mxu0 %v646
        %648 = vmatprep.subr.mxu0 0.0
        %v649 = vand.u32 %v173, 4294901760
        %v650 = vsub.f32 %v173, %v649
        %v651 = vand.u32 %v650, 4294901760
        %652 = vmatpush1.msra.mxu0 %v651
        %653 = vmatprep.subr.mxu0 0.0
        %v654 = vand.u32 %v174, 4294901760
        %v655 = vsub.f32 %v174, %v654
        %v656 = vand.u32 %v655, 4294901760
        %657 = vmatpush1.msra.mxu0 %v656
        %658 = vmatprep.subr.mxu0 0.0
        %v659 = vand.u32 %v175, 4294901760
        %v660 = vsub.f32 %v175, %v659
        %v661 = vand.u32 %v660, 4294901760
        %662 = vmatpush1.msra.mxu0 %v661
        %663 = vmatprep.subr.mxu0 0.0
        %v664 = vand.u32 %v176, 4294901760
        %v665 = vsub.f32 %v176, %v664
        %v666 = vand.u32 %v665, 4294901760
        %667 = vmatpush1.msra.mxu0 %v666
        %668 = vmatprep.subr.mxu0 0.0
        %v669 = vand.u32 %v177, 4294901760
        %v670 = vsub.f32 %v177, %v669
        %v671 = vand.u32 %v670, 4294901760
        %672 = vmatpush1.msra.mxu0 %v671
        %673 = vmatprep.subr.mxu0 0.0
        %v674 = vand.u32 %v178, 4294901760
        %v675 = vsub.f32 %v178, %v674
        %v676 = vand.u32 %v675, 4294901760
        %677 = vmatpush1.msra.mxu0 %v676
        %678 = vmatprep.subr.mxu0 0.0
        %v679 = vand.u32 %v179, 4294901760
        %v680 = vsub.f32 %v179, %v679
        %v681 = vand.u32 %v680, 4294901760
        %682 = vmatpush1.msra.mxu0 %v681
        %683 = vmatprep.subr.mxu0 0.0
        %v684 = vand.u32 %v180, 4294901760
        %v685 = vsub.f32 %v180, %v684
        %v686 = vand.u32 %v685, 4294901760
        %687 = vmatpush1.msra.mxu0 %v686
        %688 = vmatprep.subr.mxu0 0.0
        %v689 = vand.u32 %v181, 4294901760
        %v690 = vsub.f32 %v181, %v689
        %v691 = vand.u32 %v690, 4294901760
        %692 = vmatpush1.msra.mxu0 %v691
        %693 = vmatprep.subr.mxu0 0.0
        %v694 = vand.u32 %v182, 4294901760
        %v695 = vsub.f32 %v182, %v694
        %v696 = vand.u32 %v695, 4294901760
        %697 = vmatpush1.msra.mxu0 %v696
        %698 = vmatprep.subr.mxu0 0.0
        %699 = vmatpush1.msra.mxu0 0.0
        %700 = vmatprep.subr.mxu0 0.0
        %701 = vmatpush1.msra.mxu0 0.0
        %702 = vmatprep.subr.mxu0 0.0
        %703 = vmatpush1.msra.mxu0 0.0
        %704 = vmatprep.subr.mxu0 0.0
        %705 = vmatpush1.msra.mxu0 0.0
        %706 = vmatprep.subr.mxu0 0.0
        %707 = vmatpush1.msra.mxu0 0.0
        %708 = vmatprep.subr.mxu0 0.0
        %709 = vmatpush1.msra.mxu0 0.0
        %710 = vmatprep.subr.mxu0 0.0
        %711 = vmatpush1.msra.mxu0 0.0
        %712 = vmatprep.subr.mxu0 0.0
        %713 = vmatpush1.msra.mxu0 0.0
        %714 = vmatprep.subr.mxu0 0.0
        %715 = vmatpush1.msra.mxu0 0.0
        %716 = vmatprep.subr.mxu0 0.0
        %717 = vmatpush1.msra.mxu0 0.0
        %718 = vmatprep.subr.mxu0 0.0
        %719 = vmatpush1.msra.mxu0 0.0
        %720 = vmatprep.subr.mxu0 0.0
        %721 = vmatpush1.msra.mxu0 0.0
        %722 = vmatprep.subr.mxu0 0.0
        %723 = vmatpush1.msra.mxu0 0.0
        %724 = vmatprep.subr.mxu0 0.0
        %725 = vmatpush1.msra.mxu0 0.0
        %726 = vmatprep.subr.mxu0 0.0
        %727 = vmatpush1.msra.mxu0 0.0
        %728 = vmatprep.subr.mxu0 0.0
        %729 = vmatpush1.msra.mxu0 0.0
        %730 = vmatprep.mubr.f32.mxu0 0.0
        %v731 = vand.u32 %v166, 4294901760
        %732 = vmatmul.mubr.f32.gmra.mrb[0].mxu0 %v731
        %v733 = vpop.f32.mrb[0].mxu0
        %v734 = vadd.f32 %v615, %v733
        %v735 = vpop.f32.mrb[0].mxu0
        %736 = vdwg.mxu0
        %737 = vmatprep.subr.mxu0 0.0
        %v738 = vand.u32 %v167, 4294901760
        %739 = vmatpush1.msra.mxu0 %v738
        %740 = vmatprep.subr.mxu0 0.0
        %v741 = vand.u32 %v168, 4294901760
        %742 = vmatpush1.msra.mxu0 %v741
        %743 = vmatprep.subr.mxu0 0.0
        %v744 = vand.u32 %v169, 4294901760
        %745 = vmatpush1.msra.mxu0 %v744
        %746 = vmatprep.subr.mxu0 0.0
        %v747 = vand.u32 %v170, 4294901760
        %748 = vmatpush1.msra.mxu0 %v747
        %749 = vmatprep.subr.mxu0 0.0
        %v750 = vand.u32 %v171, 4294901760
        %751 = vmatpush1.msra.mxu0 %v750
        %752 = vmatprep.subr.mxu0 0.0
        %v753 = vand.u32 %v172, 4294901760
        %754 = vmatpush1.msra.mxu0 %v753
        %755 = vmatprep.subr.mxu0 0.0
        %v756 = vand.u32 %v173, 4294901760
        %757 = vmatpush1.msra.mxu0 %v756
        %758 = vmatprep.subr.mxu0 0.0
        %v759 = vand.u32 %v174, 4294901760
        %760 = vmatpush1.msra.mxu0 %v759
        %761 = vmatprep.subr.mxu0 0.0
        %v762 = vand.u32 %v175, 4294901760
        %763 = vmatpush1.msra.mxu0 %v762
        %764 = vmatprep.subr.mxu0 0.0
        %v765 = vand.u32 %v176, 4294901760
        %766 = vmatpush1.msra.mxu0 %v765
        %767 = vmatprep.subr.mxu0 0.0
        %v768 = vand.u32 %v177, 4294901760
        %769 = vmatpush1.msra.mxu0 %v768
        %770 = vmatprep.subr.mxu0 0.0
        %v771 = vand.u32 %v178, 4294901760
        %772 = vmatpush1.msra.mxu0 %v771
        %773 = vmatprep.subr.mxu0 0.0
        %v774 = vand.u32 %v179, 4294901760
        %775 = vmatpush1.msra.mxu0 %v774
        %776 = vmatprep.subr.mxu0 0.0
        %v777 = vand.u32 %v180, 4294901760
        %778 = vmatpush1.msra.mxu0 %v777
        %779 = vmatprep.subr.mxu0 0.0
        %v780 = vand.u32 %v181, 4294901760
        %781 = vmatpush1.msra.mxu0 %v780
        %782 = vmatprep.subr.mxu0 0.0
        %v783 = vand.u32 %v182, 4294901760
        %784 = vmatpush1.msra.mxu0 %v783
        %785 = vmatprep.subr.mxu0 0.0
        %786 = vmatpush1.msra.mxu0 0.0
        %787 = vmatprep.subr.mxu0 0.0
        %788 = vmatpush1.msra.mxu0 0.0
        %789 = vmatprep.subr.mxu0 0.0
        %790 = vmatpush1.msra.mxu0 0.0
        %791 = vmatprep.subr.mxu0 0.0
        %792 = vmatpush1.msra.mxu0 0.0
        %793 = vmatprep.subr.mxu0 0.0
        %794 = vmatpush1.msra.mxu0 0.0
        %795 = vmatprep.subr.mxu0 0.0
        %796 = vmatpush1.msra.mxu0 0.0
        %797 = vmatprep.subr.mxu0 0.0
        %798 = vmatpush1.msra.mxu0 0.0
        %799 = vmatprep.subr.mxu0 0.0
        %800 = vmatpush1.msra.mxu0 0.0
        %801 = vmatprep.subr.mxu0 0.0
        %802 = vmatpush1.msra.mxu0 0.0
        %803 = vmatprep.subr.mxu0 0.0
        %804 = vmatpush1.msra.mxu0 0.0
        %805 = vmatprep.subr.mxu0 0.0
        %806 = vmatpush1.msra.mxu0 0.0
        %807 = vmatprep.subr.mxu0 0.0
        %808 = vmatpush1.msra.mxu0 0.0
        %809 = vmatprep.subr.mxu0 0.0
        %810 = vmatpush1.msra.mxu0 0.0
        %811 = vmatprep.subr.mxu0 0.0
        %812 = vmatpush1.msra.mxu0 0.0
        %813 = vmatprep.subr.mxu0 0.0
        %814 = vmatpush1.msra.mxu0 0.0
        %815 = vmatprep.subr.mxu0 0.0
        %816 = vmatpush1.msra.mxu0 0.0
        %817 = vmatprep.mubr.f32.mxu0 0.0
        %v818 = vand.u32 %v166, 4294901760
        %819 = vmatmul.mubr.f32.gmra.mrb[0].mxu0 %v818
        %v820 = vpop.f32.mrb[0].mxu0
        %v821 = vadd.f32 %v734, %v820
        %v822 = vpop.f32.mrb[0].mxu0
        %823 = vdwg.mxu0
        %824 = vst [vmem:[%s149] sm:$0xff] %v821
        %s825 = sand.u32 %s72, 1
        %s826 = scalar_lea.sflag [#allocation4], %s825
        %s827 = sand.u32 %s72, 1
        %s828 = smul.addr %s827, 8
        %s829 = scalar_lea.vmem [#allocation5], %s828
        // Predicated region
        $region33: #{tpu_custom_call.1} parent=27 // pred_check
          %p830 = pneg %p82
        $region34: #{tpu_custom_call.1} parent=27 // pred_check_branch
          %832 = sbr.rel (%p830) target = $region36
        $region35: #{tpu_custom_call.1} parent=27 // pred_region
          %s834 = ssub.s32 128, 128
          %835 = vsyncadd %s826, %s834
          %s836 = smul.addr %s17, 128
          %s837 = scalar_lea.hbm %s2, %s836
          %s839 = sshll.u32 %s829, 4
          %s840 = int_to_ptr.vmem [resolvable:$true] %s839
          %842 = dma.vmem_to_hbm [thread:$0]  %s840, 128, %s837, %s826
        $region36: #{tpu_custom_call.1} parent=27 // pred_fallthru
          _
      $region28: #{tpu_custom_call.1} parent=5 // pred_fallthru
        _
      %p843 = scmp.le.s32.totalorder 2, %s12
      // Predicated region
      $region37: #{tpu_custom_call.1} parent=5 // pred_check
        %p844 = pneg %p843
      $region38: #{tpu_custom_call.1} parent=5 // pred_check_branch
        %846 = sbr.rel (%p844) target = $region40
      $region39: #{tpu_custom_call.1} parent=5 // pred_region
        %s847 = ssub.s32 %s12, 2
        // Predicated region
        $region41: #{tpu_custom_call.1} parent=39 // pred_check
          %p848 = pneg %p88
        $region42: #{tpu_custom_call.1} parent=39 // pred_check_branch
          %850 = sbr.rel (%p848) target = $region44
        $region43: #{tpu_custom_call.1} parent=39 // pred_region
          %s851 = sand.u32 %s73, 1
          %s852 = scalar_lea.sflag [#allocation4], %s851
          %s853 = sand.u32 %s73, 1
          %s854 = smul.addr %s853, 8
          %s855 = scalar_lea.vmem [#allocation5], %s854
          %856 = dma.done %s852, 128
        $region44: #{tpu_custom_call.1} parent=39 // pred_fallthru
          _
      $region40: #{tpu_custom_call.1} parent=5 // pred_fallthru
        _
    $region6: #{tpu_custom_call.1} parent=1 // loop_footer
      %s16 = sadd.s32 1, %s12
    $region7: #{tpu_custom_call.1} parent=1 // loop_footer_branch
      %11 = sbr.rel target = $region3
    $region8: #{tpu_custom_call.1} parent=1 // loop_exit
      _
    %857 = vsyncpa [#allocation3], 1
    %s858 = scalar_lea.sflag [#allocation3], 1
    %859 = vsyncpa %s858, 1
    %860 = vsyncpa [#allocation4], 1
    %s861 = scalar_lea.sflag [#allocation4], 1
    %862 = vsyncpa %s861, 1

</llo_original>
